<compile_context>
chip_gen: v7x
topology: tpu7x:2x2x1
jax: 0.10.0
libtpu: 0.0.40
codegen_flags: <defaults>
</compile_context>

<pallas_src>
import math

import jax
import jax.numpy as jnp
from jax.experimental import pallas as pl
from jax.experimental.pallas import tpu as pltpu


def _round_up(x, m):
    return ((x + m - 1) // m) * m


def _softplus(x):
    # PyTorch nn.Softplus (beta=1, threshold=20): identity above the threshold.
    return jnp.where(x > 20.0, x, jnp.log1p(jnp.exp(jnp.minimum(x, 20.0))))


def _make_kernel(n_hidden, out_dims):
    """Kernel closure.  Everything is feature-major: x is (features, tb) so the
    batch tile sits on the 128-wide lane axis.

    refs = [obs_t, W_0..W_{n_hidden-1}, W_head, bias_packed, out_fused]
      W_i         : (out_i, in_i)        VMEM-resident (constant index_map)
      bias_packed : (max_out, n_layers)  column li = bias of layer li
      obs_t       : (obs_dim, tb)
      out_fused   : (2*A, tb)            softplus(alpha|beta), lane-dense
    """
    n_layers = n_hidden + 1

    def kernel(*refs):
        obs_ref = refs[0]
        w_refs = refs[1:1 + n_layers]
        bias_ref = refs[1 + n_layers]
        out_ref = refs[2 + n_layers]

        x = obs_ref[...].astype(jnp.float32)                    # (obs_dim, tb)

        # Hidden MLP: x <- ReLU(W @ x + b); bias is an (out, 1) lane-broadcast.
        for li in range(n_hidden):
            w = w_refs[li][...]                                  # (out, in) f32
            b = bias_ref[:out_dims[li], li:li + 1]               # (out, 1)
            x = jnp.dot(w, x, preferred_element_type=jnp.float32) + b
            x = jnp.maximum(x, 0.0)

        # Fused alpha|beta head: one matmul + one softplus, lane-dense store.
        w_h = w_refs[n_hidden][...]                              # (2*A, hidden)
        b_h = bias_ref[:out_dims[n_hidden], n_hidden:n_hidden + 1]
        pre = jnp.dot(w_h, x, preferred_element_type=jnp.float32) + b_h
        out_ref[...] = _softplus(pre).astype(out_ref.dtype)

    return kernel


def _choose_tile(batch, tile_batch):
    """Batch tile on the lane axis: as large as possible and a multiple of 128
    (unmasked vst), but capped so the grid has >= 2 steps when the batch is
    large enough -- v7x has 2 TensorCores per chip."""
    if batch < 256:
        return batch                              # single full-array tile
    half = _round_up(pl.cdiv(batch, 2), 128)      # guarantees >= 2 grid steps
    tb = min(_round_up(min(tile_batch, batch), 128), half)
    return max(tb, 128)


def _vmem_tile_bytes(rows, cols, itemsize):
    # (sublane, lane)-padded size of a 2-D VMEM buffer.
    return (_round_up(max(int(rows), 1), 8)
            * _round_up(max(int(cols), 1), 128) * itemsize)


def pack_params(params):
    """One-time host-side packing (hoisted out of the per-call hot path):
      * alpha/beta head weights fused into a single (2*A, hidden) matrix,
      * weights cast to f32, PyTorch (out, in) layout kept (feature-major),
      * all biases packed column-wise into one (max_out, n_layers) array
        -> a single small DMA instead of n_layers tiny ones.
    Only arrays are returned, so the result passes cleanly through jax.jit."""
    hidden = params["hidden"]
    w_head = jnp.concatenate([params["a"][0], params["b"][0]], axis=0)
    b_head = jnp.concatenate([params["a"][1], params["b"][1]], axis=0)

    weights = tuple(w.astype(jnp.float32) for (w, _) in hidden) \
        + (w_head.astype(jnp.float32),)
    biases = [b for (_, b) in hidden] + [b_head]

    max_out = max(int(w.shape[0]) for w in weights)
    cols = []
    for b in biases:
        b = b.reshape(-1).astype(jnp.float32)
        cols.append(jnp.zeros((max_out,), jnp.float32).at[: b.shape[0]].set(b))
    bias_packed = jnp.stack(cols, axis=1)                    # (max_out, n_layers)
    return {"weights": weights, "bias_packed": bias_packed}


def amortised_beta_forward(obs, packed, *, tile_batch=2048):
    """obs: (batch, obs_dim); packed: output of pack_params.
    Returns (alpha, beta), each (batch, action_dim), dtype = obs.dtype.
    Pass bf16 obs to halve obs/output HBM traffic on v6e/v7x; compute stays f32."""
    weights = packed["weights"]
    bias_packed = packed["bias_packed"]
    n_layers = len(weights)
    n_hidden = n_layers - 1
    out_dims = tuple(int(w.shape[0]) for w in weights)
    action_dim = out_dims[-1] // 2
    batch, obs_dim = obs.shape
    io_dtype = obs.dtype
    io_size = jnp.dtype(io_dtype).itemsize

    # Feature-major: batch goes to the lane axis (cheap host-side transpose).
    obs_t = obs.T                                            # (obs_dim, batch)

    tb = _choose_tile(batch, tile_batch)
    grid = (pl.cdiv(batch, tb),)

    _const = lambda i: (0, 0)
    in_specs = [pl.BlockSpec((obs_dim, tb), lambda i: (0, i))]
    for w in weights:
        # Full-array block + constant index_map -> weight stays VMEM-resident.
        in_specs.append(pl.BlockSpec(w.shape, _const))
    in_specs.append(pl.BlockSpec(bias_packed.shape, _const))
    out_spec = pl.BlockSpec((out_dims[-1], tb), lambda i: (0, i))

    # ---- cost estimate -------------------------------------------------------
    dims = (obs_dim,) + out_dims
    flops = 2 * batch * sum(dims[i] * dims[i + 1] for i in range(n_layers))
    transcendentals = 2 * batch * out_dims[-1]        # exp + log1p per head output
    weight_bytes = sum(int(w.size) * 4 for w in weights)
    bytes_accessed = (batch * obs_dim * io_size + weight_bytes
                      + int(bias_packed.size) * 4
                      + batch * out_dims[-1] * io_size)
    cost = pl.CostEstimate(flops=int(flops),
                           transcendentals=int(transcendentals),
                           bytes_accessed=int(bytes_accessed))

    # ---- actual VMEM footprint (not a guess): ~4 MiB at tb=2048 --------------
    max_feat = max(dims)
    vmem_limit = (
        2 * sum(_vmem_tile_bytes(w.shape[0], w.shape[1], 4) for w in weights)
        + 2 * _vmem_tile_bytes(*bias_packed.shape, 4)
        + 2 * _vmem_tile_bytes(obs_dim, tb, io_size)        # double-buffered in tile
        + 2 * _vmem_tile_bytes(out_dims[-1], tb, io_size)   # double-buffered out tile
        + 3 * _vmem_tile_bytes(max_feat, tb, 4)             # activation working set
        + (2 << 20))                                        # compiler scratch headroom
    vmem_limit = int(min(max(vmem_limit, 4 << 20), 32 << 20))

    kernel = _make_kernel(n_hidden, out_dims)

    fused_t = pl.pallas_call(
        kernel,
        out_shape=jax.ShapeDtypeStruct((out_dims[-1], batch), io_dtype),
        grid=grid,
        in_specs=in_specs,
        out_specs=out_spec,
        compiler_params=pltpu.CompilerParams(
            dimension_semantics=("parallel",),
            vmem_limit_bytes=vmem_limit),
        cost_estimate=cost,
    )(obs_t, *weights, bias_packed)                          # (2*A, batch)

    alpha = fused_t[:action_dim, :].T
    beta = fused_t[action_dim:, :].T
    return alpha, beta


def init_params(key, obs_dim, hiddens, action_dim, dtype=jnp.float32):
    """PyTorch nn.Linear-style init (uniform +/- 1/sqrt(fan_in)).
    Weights stored PyTorch-style (out, in); biases (out,)."""
    params = {"hidden": []}
    dims = [obs_dim] + list(hiddens)
    keys = jax.random.split(key, 2 * len(hiddens) + 4)
    k = 0
    for i in range(len(hiddens)):
        bound = 1.0 / math.sqrt(dims[i])
        w = jax.random.uniform(keys[k], (dims[i + 1], dims[i]), minval=-bound,
                               maxval=bound, dtype=jnp.float32).astype(dtype)
        b = jax.random.uniform(keys[k + 1], (dims[i + 1],), minval=-bound,
                               maxval=bound, dtype=jnp.float32)
        params["hidden"].append((w, b))
        k += 2
    bound = 1.0 / math.sqrt(hiddens[-1])
    for name in ("a", "b"):
        w = jax.random.uniform(keys[k], (action_dim, hiddens[-1]), minval=-bound,
                               maxval=bound, dtype=jnp.float32).astype(dtype)
        bi = jax.random.uniform(keys[k + 1], (action_dim,), minval=-bound,
                                maxval=bound, dtype=jnp.float32)
        params[name] = (w, bi)
        k += 2
    return params


def _reference(obs, params):
    x = obs.astype(jnp.float32)
    for (w, b) in params["hidden"]:
        x = jnp.maximum(x @ w.astype(jnp.float32).T + b, 0.0)
    alpha = jax.nn.softplus(x @ params["a"][0].astype(jnp.float32).T + params["a"][1])
    beta = jax.nn.softplus(x @ params["b"][0].astype(jnp.float32).T + params["b"][1])
    return alpha, beta


if __name__ == "__main__":
    key = jax.random.PRNGKey(0)
    k_obs, k_par, k_obs2 = jax.random.split(key, 3)

    # Small shapes consistent with the module's forward: obs is (B, obs_dim).
    batch, obs_dim, hiddens, action_dim = 8, 16, (32, 32), 8
    obs = jax.random.normal(k_obs, (batch, obs_dim), dtype=jnp.float32)
    params = init_params(k_par, obs_dim, hiddens, action_dim)
    packed = pack_params(params)          # one-time packing, outside the hot path

    fwd = jax.jit(amortised_beta_forward, static_argnames=("tile_batch",))

    alpha, beta = fwd(obs, packed)
    jax.block_until_ready((alpha, beta))
    ref_a, ref_b = _reference(obs, params)
    assert alpha.shape == (batch, action_dim) and beta.shape == (batch, action_dim)
    assert jnp.allclose(alpha, ref_a, atol=1e-5, rtol=1e-5)
    assert jnp.allclose(beta, ref_b, atol=1e-5, rtol=1e-5)

    # Larger batch exercises the lane-dense tiled grid (2 parallel steps of 256).
    batch2 = 512
    obs2 = jax.random.normal(k_obs2, (batch2, obs_dim), dtype=jnp.float32)
    alpha2, beta2 = fwd(obs2, packed)
    jax.block_until_ready((alpha2, beta2))
    ref_a2, ref_b2 = _reference(obs2, params)
    assert jnp.allclose(alpha2, ref_a2, atol=1e-5, rtol=1e-5)
    assert jnp.allclose(beta2, ref_b2, atol=1e-5, rtol=1e-5)

    # bf16 I/O path (halves obs/output HBM traffic on v6e/v7x); compute stays f32.
    obs2_bf16 = obs2.astype(jnp.bfloat16)
    a_bf, b_bf = fwd(obs2_bf16, packed)
    jax.block_until_ready((a_bf, b_bf))
    ref_a_bf, ref_b_bf = _reference(obs2_bf16.astype(jnp.float32), params)
    assert a_bf.dtype == jnp.bfloat16 and b_bf.dtype == jnp.bfloat16
    assert jnp.allclose(a_bf.astype(jnp.float32), ref_a_bf, atol=2e-2, rtol=2e-2)
    assert jnp.allclose(b_bf.astype(jnp.float32), ref_b_bf, atol=2e-2, rtol=2e-2)

    print("KERNEL_OK")
</pallas_src>

<mosaic_0001>
module attributes {stable_mosaic.version = 11 : i64} {
  func.func @kernel(%arg0: i32, %arg1: memref<16x8xf32, #tpu.memory_space<vmem>>, %arg2: memref<32x16xf32, #tpu.memory_space<vmem>>, %arg3: memref<32x32xf32, #tpu.memory_space<vmem>>, %arg4: memref<16x32xf32, #tpu.memory_space<vmem>>, %arg5: memref<32x3xf32, #tpu.memory_space<vmem>>, %arg6: memref<16x8xf32, #tpu.memory_space<vmem>>) attributes {dimension_semantics = [#tpu.dimension_semantics<parallel>], iteration_bounds = array<i64: 1>, scalar_prefetch = 0 : i64, scratch_operands = 0 : i64, tpu.core_type = #tpu.core_type<tc>, window_params = [{transform_indices = @transform_0, window_bounds = array<i64: 16, 8>}, {pipeline_mode = #tpu.pipeline_mode<synchronous>, transform_indices = @transform_1, window_bounds = array<i64: 32, 16>}, {pipeline_mode = #tpu.pipeline_mode<synchronous>, transform_indices = @transform_2, window_bounds = array<i64: 32, 32>}, {pipeline_mode = #tpu.pipeline_mode<synchronous>, transform_indices = @transform_3, window_bounds = array<i64: 16, 32>}, {pipeline_mode = #tpu.pipeline_mode<synchronous>, transform_indices = @transform_4, window_bounds = array<i64: 32, 3>}, {transform_indices = @transform_5, window_bounds = array<i64: 16, 8>}]} {
    %c0 = arith.constant 0 : index
    %c0_0 = arith.constant 0 : index
    %0 = vector.load %arg1[%c0, %c0_0] : memref<16x8xf32, #tpu.memory_space<vmem>>, vector<16x8xf32>
    %c0_1 = arith.constant 0 : index
    %c0_2 = arith.constant 0 : index
    %1 = vector.load %arg2[%c0_1, %c0_2] : memref<32x16xf32, #tpu.memory_space<vmem>>, vector<32x16xf32>
    %c0_3 = arith.constant 0 : index
    %c0_4 = arith.constant 0 : index
    %2 = vector.load %arg5[%c0_3, %c0_4] : memref<32x3xf32, #tpu.memory_space<vmem>>, vector<32x1xf32>
    %cst = arith.constant dense<0.000000e+00> : vector<32x8xf32>
    %3 = tpu.matmul %1, %0, %cst {dimension_numbers = #tpu.dot_dimension_numbers<[1], [0], [0], [1], [0, 0, 1, 1], [], []>} : vector<32x16xf32>, vector<16x8xf32>, vector<32x8xf32> -> vector<32x8xf32>
    %4 = vector.broadcast %2 : vector<32x1xf32> to vector<32x8xf32>
    %5 = arith.addf %3, %4 : vector<32x8xf32>
    %cst_5 = arith.constant 0.000000e+00 : f32
    %6 = vector.broadcast %cst_5 : f32 to vector<32x8xf32>
    %7 = arith.maximumf %5, %6 : vector<32x8xf32>
    %c0_6 = arith.constant 0 : index
    %c0_7 = arith.constant 0 : index
    %8 = vector.load %arg3[%c0_6, %c0_7] : memref<32x32xf32, #tpu.memory_space<vmem>>, vector<32x32xf32>
    %c0_8 = arith.constant 0 : index
    %c1 = arith.constant 1 : index
    %9 = vector.load %arg5[%c0_8, %c1] : memref<32x3xf32, #tpu.memory_space<vmem>>, vector<32x1xf32>
    %cst_9 = arith.constant dense<0.000000e+00> : vector<32x8xf32>
    %10 = tpu.matmul %8, %7, %cst_9 {dimension_numbers = #tpu.dot_dimension_numbers<[1], [0], [0], [1], [0, 0, 1, 1], [], []>} : vector<32x32xf32>, vector<32x8xf32>, vector<32x8xf32> -> vector<32x8xf32>
    %11 = vector.broadcast %9 : vector<32x1xf32> to vector<32x8xf32>
    %12 = arith.addf %10, %11 : vector<32x8xf32>
    %cst_10 = arith.constant 0.000000e+00 : f32
    %13 = vector.broadcast %cst_10 : f32 to vector<32x8xf32>
    %14 = arith.maximumf %12, %13 : vector<32x8xf32>
    %c0_11 = arith.constant 0 : index
    %c0_12 = arith.constant 0 : index
    %15 = vector.load %arg4[%c0_11, %c0_12] : memref<16x32xf32, #tpu.memory_space<vmem>>, vector<16x32xf32>
    %c0_13 = arith.constant 0 : index
    %c2 = arith.constant 2 : index
    %16 = vector.load %arg5[%c0_13, %c2] : memref<32x3xf32, #tpu.memory_space<vmem>>, vector<16x1xf32>
    %cst_14 = arith.constant dense<0.000000e+00> : vector<16x8xf32>
    %17 = tpu.matmul %15, %14, %cst_14 {dimension_numbers = #tpu.dot_dimension_numbers<[1], [0], [0], [1], [0, 0, 1, 1], [], []>} : vector<16x32xf32>, vector<32x8xf32>, vector<16x8xf32> -> vector<16x8xf32>
    %18 = vector.broadcast %16 : vector<16x1xf32> to vector<16x8xf32>
    %19 = arith.addf %17, %18 : vector<16x8xf32>
    %cst_15 = arith.constant 2.000000e+01 : f32
    %20 = vector.broadcast %cst_15 : f32 to vector<16x8xf32>
    %21 = arith.cmpf ogt, %19, %20 : vector<16x8xf32>
    %cst_16 = arith.constant 2.000000e+01 : f32
    %22 = vector.broadcast %cst_16 : f32 to vector<16x8xf32>
    %23 = arith.minimumf %19, %22 : vector<16x8xf32>
    %24 = math.exp %23 : vector<16x8xf32>
    %25 = math.log1p %24 : vector<16x8xf32>
    %26 = arith.select %21, %19, %25 : vector<16x8xi1>, vector<16x8xf32>
    %c0_17 = arith.constant 0 : index
    %c0_18 = arith.constant 0 : index
    %27 = vector.load %arg6[%c0_17, %c0_18] : memref<16x8xf32, #tpu.memory_space<vmem>>, vector<16x8xf32>
    tpu.vector_store %arg6[%c0_17, %c0_18], %26 {strides = array<i32>} : memref<16x8xf32, #tpu.memory_space<vmem>>, vector<16x8xf32>,
    return
  }
  func.func @transform_0(%arg0: i32) -> (i32, i32) {
    %c0_i32 = arith.constant 0 : i32
    %c0_i32_0 = arith.constant 0 : i32
    return %c0_i32, %arg0 : i32, i32
  }
  func.func @transform_1(%arg0: i32) -> (i32, i32) {
    %c0_i32 = arith.constant 0 : i32
    %c0_i32_0 = arith.constant 0 : i32
    %c0_i32_1 = arith.constant 0 : i32
    return %c0_i32, %c0_i32_0 : i32, i32
  }
  func.func @transform_2(%arg0: i32) -> (i32, i32) {
    %c0_i32 = arith.constant 0 : i32
    %c0_i32_0 = arith.constant 0 : i32
    %c0_i32_1 = arith.constant 0 : i32
    return %c0_i32, %c0_i32_0 : i32, i32
  }
  func.func @transform_3(%arg0: i32) -> (i32, i32) {
    %c0_i32 = arith.constant 0 : i32
    %c0_i32_0 = arith.constant 0 : i32
    %c0_i32_1 = arith.constant 0 : i32
    return %c0_i32, %c0_i32_0 : i32, i32
  }
  func.func @transform_4(%arg0: i32) -> (i32, i32) {
    %c0_i32 = arith.constant 0 : i32
    %c0_i32_0 = arith.constant 0 : i32
    %c0_i32_1 = arith.constant 0 : i32
    return %c0_i32, %c0_i32_0 : i32, i32
  }
  func.func @transform_5(%arg0: i32) -> (i32, i32) {
    %c0_i32 = arith.constant 0 : i32
    %c0_i32_0 = arith.constant 0 : i32
    return %c0_i32, %arg0 : i32, i32
  }
}

</mosaic_0001>

<llo_original>
// kernel: amortised_beta_forward.1
$region0: #{amortised_beta_forward.1}
  #allocation0 [shape = 'u32[]', space=smem, size = 0x4, offset = 0x4, fixed_abs, tag = 'smem constant byte address 0x4 - core index']
  #allocation1 [shape = 'u32[144,128]{1,0:T(1,128)}', space=vmem, size = 0x12000, scoped, tag = 'internal scratch']
  %s0 = inlined_call_operand.vmem [shape: f32[16,8], index: 0, kind: input, shape index: {}]
  %s1 = inlined_call_operand.vmem [shape: f32[32,16], index: 1, kind: input, shape index: {}]
  %s2 = inlined_call_operand.vmem [shape: f32[32,32], index: 2, kind: input, shape index: {}]
  %s3 = inlined_call_operand.vmem [shape: f32[16,32], index: 3, kind: input, shape index: {}]
  %s4 = inlined_call_operand.vmem [shape: f32[32,3], index: 4, kind: input, shape index: {}]
  %s5 = inlined_call_operand.vmem [shape: f32[16,8], index: 5, kind: output, shape index: {}]
  %s6 = sld [smem:[#allocation0]]
  $region30: #{amortised_beta_forward.1} parent=0
    _
  %s8 = ssub.s32 1, %s6
  %s9 = scalar_select 0, %s8, %s6
  // Predicated region
  $region2: #{amortised_beta_forward.1} parent=0 // pred_check
    _
  $region3: #{amortised_beta_forward.1} parent=0 // pred_check_branch
    %11 = sbr.rel (0) target = $region5
  $region4: #{amortised_beta_forward.1} parent=0 // pred_region
    _
  $region5: #{amortised_beta_forward.1} parent=0 // pred_fallthru
    _
  // Predicated region
  $region6: #{amortised_beta_forward.1} parent=0 // pred_check
    _
  $region7: #{amortised_beta_forward.1} parent=0 // pred_check_branch
    %13 = sbr.rel (0) target = $region9
  $region8: #{amortised_beta_forward.1} parent=0 // pred_region
    _
  $region9: #{amortised_beta_forward.1} parent=0 // pred_fallthru
    _
  // Predicated region
  $region10: #{amortised_beta_forward.1} parent=0 // pred_check
    _
  $region11: #{amortised_beta_forward.1} parent=0 // pred_check_branch
    %15 = sbr.rel (0) target = $region13
  $region12: #{amortised_beta_forward.1} parent=0 // pred_region
    _
  $region13: #{amortised_beta_forward.1} parent=0 // pred_fallthru
    _
  // Predicated region
  $region14: #{amortised_beta_forward.1} parent=0 // pred_check
    _
  $region15: #{amortised_beta_forward.1} parent=0 // pred_check_branch
    %17 = sbr.rel (0) target = $region17
  $region16: #{amortised_beta_forward.1} parent=0 // pred_region
    _
  $region17: #{amortised_beta_forward.1} parent=0 // pred_fallthru
    _
  // Predicated region
  $region18: #{amortised_beta_forward.1} parent=0 // pred_check
    _
  $region19: #{amortised_beta_forward.1} parent=0 // pred_check_branch
    %19 = sbr.rel (0) target = $region21
  $region20: #{amortised_beta_forward.1} parent=0 // pred_region
    _
  $region21: #{amortised_beta_forward.1} parent=0 // pred_fallthru
    _
  %v20 = vld [vmem:[%s0] sm:$0xff]
  %v21 = vld [vmem:[%s0 + $0x8] sm:$0xff]
  %v22 = vld [vmem:[%s1] sm:$0xff]
  %v23 = vld [vmem:[%s1 + $0x8] sm:$0xff]
  %v24 = vld [vmem:[%s1 + $0x10] sm:$0xff]
  %v25 = vld [vmem:[%s1 + $0x18] sm:$0xff]
  %v26 = vld [vmem:[%s4] sm:$0xff]
  %v27 = vld [vmem:[%s4 + $0x8] sm:$0xff]
  %v28 = vld [vmem:[%s4 + $0x10] sm:$0xff]
  %v29 = vld [vmem:[%s4 + $0x18] sm:$0xff]
  %31 = vset.pattern.permute.xlu0 0
  %32 = vperm.xlu0 %31, %v26
  %v33 = vpop.permute.xlu0 %32
  %36 = vset.pattern.permute.xlu0 0
  %37 = vperm.xlu0 %36, %v27
  %v38 = vpop.permute.xlu0 %37
  %41 = vset.pattern.permute.xlu0 0
  %42 = vperm.xlu0 %41, %v28
  %v43 = vpop.permute.xlu0 %42
  %46 = vset.pattern.permute.xlu0 0
  %47 = vperm.xlu0 %46, %v29
  %v48 = vpop.permute.xlu0 %47
  %vm50 = vcmask 130048
  %v52 = vsel %vm50, %v22, 0
  %v55 = vsel %vm50, %v23, 0
  %v58 = vsel %vm50, %v24, 0
  %v61 = vsel %vm50, %v25, 0
  %63 = vmatprep.subr.mxu0 0.0
  %64 = vmatpush1.msra.mxu0 %v20
  %65 = vmatprep.subr.mxu0 0.0
  %66 = vmatpush1.msra.mxu0 %v21
  %67 = vmatprep.subr.mxu0 0.0
  %68 = vmatpush1.msra.mxu0 0.0
  %69 = vmatprep.subr.mxu0 0.0
  %70 = vmatpush1.msra.mxu0 0.0
  %71 = vmatprep.subr.mxu0 0.0
  %72 = vmatpush1.msra.mxu0 0.0
  %73 = vmatprep.subr.mxu0 0.0
  %74 = vmatpush1.msra.mxu0 0.0
  %75 = vmatprep.subr.mxu0 0.0
  %76 = vmatpush1.msra.mxu0 0.0
  %77 = vmatprep.subr.mxu0 0.0
  %78 = vmatpush1.msra.mxu0 0.0
  %79 = vmatprep.subr.mxu0 0.0
  %80 = vmatpush1.msra.mxu0 0.0
  %81 = vmatprep.subr.mxu0 0.0
  %82 = vmatpush1.msra.mxu0 0.0
  %83 = vmatprep.subr.mxu0 0.0
  %84 = vmatpush1.msra.mxu0 0.0
  %85 = vmatprep.subr.mxu0 0.0
  %86 = vmatpush1.msra.mxu0 0.0
  %87 = vmatprep.subr.mxu0 0.0
  %88 = vmatpush1.msra.mxu0 0.0
  %89 = vmatprep.subr.mxu0 0.0
  %90 = vmatpush1.msra.mxu0 0.0
  %91 = vmatprep.subr.mxu0 0.0
  %92 = vmatpush1.msra.mxu0 0.0
  %93 = vmatprep.subr.mxu0 0.0
  %94 = vmatpush1.msra.mxu0 0.0
  %95 = vmatprep.subr.mxu0 0.0
  %96 = vmatpush1.msra.mxu0 0.0
  %97 = vmatprep.subr.mxu0 0.0
  %98 = vmatpush1.msra.mxu0 0.0
  %99 = vmatprep.subr.mxu0 0.0
  %100 = vmatpush1.msra.mxu0 0.0
  %101 = vmatprep.subr.mxu0 0.0
  %102 = vmatpush1.msra.mxu0 0.0
  %103 = vmatprep.subr.mxu0 0.0
  %104 = vmatpush1.msra.mxu0 0.0
  %105 = vmatprep.subr.mxu0 0.0
  %106 = vmatpush1.msra.mxu0 0.0
  %107 = vmatprep.subr.mxu0 0.0
  %108 = vmatpush1.msra.mxu0 0.0
  %109 = vmatprep.subr.mxu0 0.0
  %110 = vmatpush1.msra.mxu0 0.0
  %111 = vmatprep.subr.mxu0 0.0
  %112 = vmatpush1.msra.mxu0 0.0
  %113 = vmatprep.subr.mxu0 0.0
  %114 = vmatpush1.msra.mxu0 0.0
  %115 = vmatprep.subr.mxu0 0.0
  %116 = vmatpush1.msra.mxu0 0.0
  %117 = vmatprep.subr.mxu0 0.0
  %118 = vmatpush1.msra.mxu0 0.0
  %119 = vmatprep.subr.mxu0 0.0
  %120 = vmatpush1.msra.mxu0 0.0
  %121 = vmatprep.subr.mxu0 0.0
  %122 = vmatpush1.msra.mxu0 0.0
  %123 = vmatprep.subr.mxu0 0.0
  %124 = vmatpush1.msra.mxu0 0.0
  %125 = vmatprep.subr.mxu0 0.0
  %126 = vmatpush1.msra.mxu0 0.0
  %127 = vmatprep.mubr.f32.mxu0 0.0
  %128 = vmatmul.mubr.f32.gmra.mrb[0].mxu0 %v52
  %v129 = vpop.f32.mrb[0].mxu0
  %v130 = vadd.f32 %v33, %v129
  %v131 = vpop.f32.mrb[0].mxu0
  %132 = vmatprep.mubr.f32.mxu0 0.0
  %133 = vmatmul.mubr.f32.gmra.mrb[0].mxu0 %v55
  %v134 = vpop.f32.mrb[0].mxu0
  %v135 = vadd.f32 %v38, %v134
  %v136 = vpop.f32.mrb[0].mxu0
  %137 = vmatprep.mubr.f32.mxu0 0.0
  %138 = vmatmul.mubr.f32.gmra.mrb[0].mxu0 %v58
  %v139 = vpop.f32.mrb[0].mxu0
  %v140 = vadd.f32 %v43, %v139
  %v141 = vpop.f32.mrb[0].mxu0
  %142 = vmatprep.mubr.f32.mxu0 0.0
  %143 = vmatmul.mubr.f32.gmra.mrb[0].mxu0 %v61
  %v144 = vpop.f32.mrb[0].mxu0
  %v145 = vadd.f32 %v48, %v144
  %v146 = vpop.f32.mrb[0].mxu0
  %147 = vdwg.mxu0
  %v148 = vmax.f32 %v130, 0.0
  %v149 = vmax.f32 %v135, 0.0
  %v150 = vmax.f32 %v140, 0.0
  %v151 = vmax.f32 %v145, 0.0
  %v152 = vld [vmem:[%s2] sm:$0xff]
  %v153 = vld [vmem:[%s2 + $0x8] sm:$0xff]
  %v154 = vld [vmem:[%s2 + $0x10] sm:$0xff]
  %v155 = vld [vmem:[%s2 + $0x18] sm:$0xff]
  %156 = vset.pattern.permute.xlu0 1
  %157 = vperm.xlu0 %156, %v26
  %v158 = vpop.permute.xlu0 %157
  %160 = vset.pattern.permute.xlu0 1
  %161 = vperm.xlu0 %160, %v27
  %v162 = vpop.permute.xlu0 %161
  %164 = vset.pattern.permute.xlu0 1
  %165 = vperm.xlu0 %164, %v28
  %v166 = vpop.permute.xlu0 %165
  %168 = vset.pattern.permute.xlu0 1
  %169 = vperm.xlu0 %168, %v29
  %v170 = vpop.permute.xlu0 %169
  %vm172 = vcmask 261120
  %v174 = vsel %vm172, %v152, 0
  %v177 = vsel %vm172, %v153, 0
  %v180 = vsel %vm172, %v154, 0
  %v183 = vsel %vm172, %v155, 0
  %185 = vmatprep.subr.mxu0 0.0
  %186 = vmatpush1.msra.mxu0 %v148
  %187 = vmatprep.subr.mxu0 0.0
  %188 = vmatpush1.msra.mxu0 %v149
  %189 = vmatprep.subr.mxu0 0.0
  %190 = vmatpush1.msra.mxu0 %v150
  %191 = vmatprep.subr.mxu0 0.0
  %192 = vmatpush1.msra.mxu0 %v151
  %193 = vmatprep.subr.mxu0 0.0
  %194 = vmatpush1.msra.mxu0 0.0
  %195 = vmatprep.subr.mxu0 0.0
  %196 = vmatpush1.msra.mxu0 0.0
  %197 = vmatprep.subr.mxu0 0.0
  %198 = vmatpush1.msra.mxu0 0.0
  %199 = vmatprep.subr.mxu0 0.0
  %200 = vmatpush1.msra.mxu0 0.0
  %201 = vmatprep.subr.mxu0 0.0
  %202 = vmatpush1.msra.mxu0 0.0
  %203 = vmatprep.subr.mxu0 0.0
  %204 = vmatpush1.msra.mxu0 0.0
  %205 = vmatprep.subr.mxu0 0.0
  %206 = vmatpush1.msra.mxu0 0.0
  %207 = vmatprep.subr.mxu0 0.0
  %208 = vmatpush1.msra.mxu0 0.0
  %209 = vmatprep.subr.mxu0 0.0
  %210 = vmatpush1.msra.mxu0 0.0
  %211 = vmatprep.subr.mxu0 0.0
  %212 = vmatpush1.msra.mxu0 0.0
  %213 = vmatprep.subr.mxu0 0.0
  %214 = vmatpush1.msra.mxu0 0.0
  %215 = vmatprep.subr.mxu0 0.0
  %216 = vmatpush1.msra.mxu0 0.0
  %217 = vmatprep.subr.mxu0 0.0
  %218 = vmatpush1.msra.mxu0 0.0
  %219 = vmatprep.subr.mxu0 0.0
  %220 = vmatpush1.msra.mxu0 0.0
  %221 = vmatprep.subr.mxu0 0.0
  %222 = vmatpush1.msra.mxu0 0.0
  %223 = vmatprep.subr.mxu0 0.0
  %224 = vmatpush1.msra.mxu0 0.0
  %225 = vmatprep.subr.mxu0 0.0
  %226 = vmatpush1.msra.mxu0 0.0
  %227 = vmatprep.subr.mxu0 0.0
  %228 = vmatpush1.msra.mxu0 0.0
  %229 = vmatprep.subr.mxu0 0.0
  %230 = vmatpush1.msra.mxu0 0.0
  %231 = vmatprep.subr.mxu0 0.0
  %232 = vmatpush1.msra.mxu0 0.0
  %233 = vmatprep.subr.mxu0 0.0
  %234 = vmatpush1.msra.mxu0 0.0
  %235 = vmatprep.subr.mxu0 0.0
  %236 = vmatpush1.msra.mxu0 0.0
  %237 = vmatprep.subr.mxu0 0.0
  %238 = vmatpush1.msra.mxu0 0.0
  %239 = vmatprep.subr.mxu0 0.0
  %240 = vmatpush1.msra.mxu0 0.0
  %241 = vmatprep.subr.mxu0 0.0
  %242 = vmatpush1.msra.mxu0 0.0
  %243 = vmatprep.subr.mxu0 0.0
  %244 = vmatpush1.msra.mxu0 0.0
  %245 = vmatprep.subr.mxu0 0.0
  %246 = vmatpush1.msra.mxu0 0.0
  %247 = vmatprep.subr.mxu0 0.0
  %248 = vmatpush1.msra.mxu0 0.0
  %249 = vmatprep.mubr.f32.mxu0 0.0
  %250 = vmatmul.mubr.f32.gmra.mrb[0].mxu0 %v174
  %v251 = vpop.f32.mrb[0].mxu0
  %v252 = vadd.f32 %v158, %v251
  %v253 = vpop.f32.mrb[0].mxu0
  %254 = vmatprep.mubr.f32.mxu0 0.0
  %255 = vmatmul.mubr.f32.gmra.mrb[0].mxu0 %v177
  %v256 = vpop.f32.mrb[0].mxu0
  %v257 = vadd.f32 %v162, %v256
  %v258 = vpop.f32.mrb[0].mxu0
  %259 = vmatprep.mubr.f32.mxu0 0.0
  %260 = vmatmul.mubr.f32.gmra.mrb[0].mxu0 %v180
  %v261 = vpop.f32.mrb[0].mxu0
  %v262 = vadd.f32 %v166, %v261
  %v263 = vpop.f32.mrb[0].mxu0
  %264 = vmatprep.mubr.f32.mxu0 0.0
  %265 = vmatmul.mubr.f32.gmra.mrb[0].mxu0 %v183
  %v266 = vpop.f32.mrb[0].mxu0
  %v267 = vadd.f32 %v170, %v266
  %v268 = vpop.f32.mrb[0].mxu0
  %269 = vdwg.mxu0
  %v270 = vmax.f32 %v252, 0.0
  %v271 = vmax.f32 %v257, 0.0
  %v272 = vmax.f32 %v262, 0.0
  %v273 = vmax.f32 %v267, 0.0
  %v274 = vld [vmem:[%s3] sm:$0xff]
  %v275 = vld [vmem:[%s3 + $0x8] sm:$0xff]
  %v276 = vld [vmem:[%s4] sm:$0xff]
  %v277 = vld [vmem:[%s4 + $0x8] sm:$0xff]
  %279 = vset.pattern.permute.xlu0 2
  %280 = vperm.xlu0 %279, %v276
  %v281 = vpop.permute.xlu0 %280
  %284 = vset.pattern.permute.xlu0 2
  %285 = vperm.xlu0 %284, %v277
  %v286 = vpop.permute.xlu0 %285
  %v289 = vsel %vm172, %v274, 0
  %v292 = vsel %vm172, %v275, 0
  %294 = vmatprep.subr.mxu0 0.0
  %295 = vmatpush1.msra.mxu0 %v270
  %296 = vmatprep.subr.mxu0 0.0
  %297 = vmatpush1.msra.mxu0 %v271
  %298 = vmatprep.subr.mxu0 0.0
  %299 = vmatpush1.msra.mxu0 %v272
  %300 = vmatprep.subr.mxu0 0.0
  %301 = vmatpush1.msra.mxu0 %v273
  %302 = vmatprep.subr.mxu0 0.0
  %303 = vmatpush1.msra.mxu0 0.0
  %304 = vmatprep.subr.mxu0 0.0
  %305 = vmatpush1.msra.mxu0 0.0
  %306 = vmatprep.subr.mxu0 0.0
  %307 = vmatpush1.msra.mxu0 0.0
  %308 = vmatprep.subr.mxu0 0.0
  %309 = vmatpush1.msra.mxu0 0.0
  %310 = vmatprep.subr.mxu0 0.0
  %311 = vmatpush1.msra.mxu0 0.0
  %312 = vmatprep.subr.mxu0 0.0
  %313 = vmatpush1.msra.mxu0 0.0
  %314 = vmatprep.subr.mxu0 0.0
  %315 = vmatpush1.msra.mxu0 0.0
  %316 = vmatprep.subr.mxu0 0.0
  %317 = vmatpush1.msra.mxu0 0.0
  %318 = vmatprep.subr.mxu0 0.0
  %319 = vmatpush1.msra.mxu0 0.0
  %320 = vmatprep.subr.mxu0 0.0
  %321 = vmatpush1.msra.mxu0 0.0
  %322 = vmatprep.subr.mxu0 0.0
  %323 = vmatpush1.msra.mxu0 0.0
  %324 = vmatprep.subr.mxu0 0.0
  %325 = vmatpush1.msra.mxu0 0.0
  %326 = vmatprep.subr.mxu0 0.0
  %327 = vmatpush1.msra.mxu0 0.0
  %328 = vmatprep.subr.mxu0 0.0
  %329 = vmatpush1.msra.mxu0 0.0
  %330 = vmatprep.subr.mxu0 0.0
  %331 = vmatpush1.msra.mxu0 0.0
  %332 = vmatprep.subr.mxu0 0.0
  %333 = vmatpush1.msra.mxu0 0.0
  %334 = vmatprep.subr.mxu0 0.0
  %335 = vmatpush1.msra.mxu0 0.0
  %336 = vmatprep.subr.mxu0 0.0
  %337 = vmatpush1.msra.mxu0 0.0
  %338 = vmatprep.subr.mxu0 0.0
  %339 = vmatpush1.msra.mxu0 0.0
  %340 = vmatprep.subr.mxu0 0.0
  %341 = vmatpush1.msra.mxu0 0.0
  %342 = vmatprep.subr.mxu0 0.0
  %343 = vmatpush1.msra.mxu0 0.0
  %344 = vmatprep.subr.mxu0 0.0
  %345 = vmatpush1.msra.mxu0 0.0
  %346 = vmatprep.subr.mxu0 0.0
  %347 = vmatpush1.msra.mxu0 0.0
  %348 = vmatprep.subr.mxu0 0.0
  %349 = vmatpush1.msra.mxu0 0.0
  %350 = vmatprep.subr.mxu0 0.0
  %351 = vmatpush1.msra.mxu0 0.0
  %352 = vmatprep.subr.mxu0 0.0
  %353 = vmatpush1.msra.mxu0 0.0
  %354 = vmatprep.subr.mxu0 0.0
  %355 = vmatpush1.msra.mxu0 0.0
  %356 = vmatprep.subr.mxu0 0.0
  %357 = vmatpush1.msra.mxu0 0.0
  %358 = vmatprep.mubr.f32.mxu0 0.0
  %359 = vmatmul.mubr.f32.gmra.mrb[0].mxu0 %v289
  %v360 = vpop.f32.mrb[0].mxu0
  %v361 = vadd.f32 %v281, %v360
  %v362 = vpop.f32.mrb[0].mxu0
  %363 = vmatprep.mubr.f32.mxu0 0.0
  %364 = vmatmul.mubr.f32.gmra.mrb[0].mxu0 %v292
  %v365 = vpop.f32.mrb[0].mxu0
  %v366 = vadd.f32 %v286, %v365
  %v367 = vpop.f32.mrb[0].mxu0
  %368 = vdwg.mxu0
  %vm369 = vcmp.gt.f32.partialorder %v361, 20.0
  %vm370 = vcmp.gt.f32.partialorder %v366, 20.0
  %v371 = vmin.f32 %v361, 20.0
  %v372 = vmin.f32 %v366, 20.0
  %v373 = vmul.f32 %v371, 1.442695
  %v374 = vpow.pop %v373
  %v375 = vmul.f32 %v372, 1.442695
  %v376 = vpow.pop %v375
  %v377 = vadd.f32 %v374, 1.0
  %v378 = vlog2.pop %v377
  %v379 = vmul.f32 %v378, 0.6931472
  %v380 = vmul.f32 -0.5, %v374
  %v381 = vadd.f32 %v380, 1.0
  %v382 = vmul.f32 %v381, %v374
  %v383 = vand.u32 2147483647, %v374
  %vm384 = vcmp.lt.f32.partialorder %v383, 0.0004427343
  %v385 = vsel %vm384, %v382, %v379
  %v386 = vadd.f32 %v376, 1.0
  %v387 = vlog2.pop %v386
  %v388 = vmul.f32 %v387, 0.6931472
  %v389 = vmul.f32 -0.5, %v376
  %v390 = vadd.f32 %v389, 1.0
  %v391 = vmul.f32 %v390, %v376
  %v392 = vand.u32 2147483647, %v376
  %vm393 = vcmp.lt.f32.partialorder %v392, 0.0004427343
  %v394 = vsel %vm393, %v391, %v388
  %v395 = vsel %vm369, %v361, %v385
  %v396 = vsel %vm370, %v366, %v394
  %vm397 = vcmask 64512
  %398 = vst.msk [vmem:[%s5] sm:$0xff] %vm397, %v395
  %399 = vst.msk [vmem:[%s5 + $0x8] sm:$0xff] %vm397, %v396
  // Predicated region
  $region22: #{amortised_beta_forward.1} parent=0 // pred_check
    _
  $region23: #{amortised_beta_forward.1} parent=0 // pred_check_branch
    %401 = sbr.rel (0) target = $region25
  $region24: #{amortised_beta_forward.1} parent=0 // pred_region
    _
  $region25: #{amortised_beta_forward.1} parent=0 // pred_fallthru
    _
  // Predicated region
  $region26: #{amortised_beta_forward.1} parent=0 // pred_check
    _
  $region27: #{amortised_beta_forward.1} parent=0 // pred_check_branch
    %403 = sbr.rel (0) target = $region29
  $region28: #{amortised_beta_forward.1} parent=0 // pred_region
    _
  $region29: #{amortised_beta_forward.1} parent=0 // pred_fallthru
    _

</llo_original>
